<compile_context>
chip_gen: v6e
topology: v6e:2x2x1
jax: 0.10.0
libtpu: 0.0.40
codegen_flags: <defaults>
</compile_context>

<pallas_src>
import functools

import jax
import jax.numpy as jnp
from jax import lax
from jax.experimental import pallas as pl
from jax.experimental.pallas import tpu as pltpu


# ---------------------------------------------------------------------------
# Pallas kernels
# ---------------------------------------------------------------------------
def _low_branch_kernel(pat_l_ref, pat_hp_ref, w_lcat_ref, w_hl_ref, b_l_ref,
                       y_l_ref, l2h_ref, *, clo):
    """Low-frequency output + raw (BN-scale-folded) l2h pre-activation.

    pat_l_ref : (1, 9*Cli, T)       bf16 im2col of X_l            (tile of Nl)
    pat_hp_ref: (1, 9*Chi, T)       bf16 im2col of avgpool2(X_h)
    w_lcat_ref: (Clo+Cho, 9*Cli)    bf16 [scale_l*w_l2l ; scale_h*w_l2h]
    w_hl_ref  : (Clo, 9*Chi)        bf16 scale_l*w_h2l
    b_l_ref   : (Clo, 1)            f32 folded BN bias
    y_l_ref   : (1, Clo, T)         relu(bn_l(l2l + h2l))
    l2h_ref   : (1, Cho, T)         bf16 scale_h * l2h(X_l), low-res, pre-bias
    """
    cat = jnp.dot(w_lcat_ref[...], pat_l_ref[0],
                  preferred_element_type=jnp.float32)          # (Clo+Cho, T)
    hl = jnp.dot(w_hl_ref[...], pat_hp_ref[0],
                 preferred_element_type=jnp.float32)           # (Clo, T)
    ll = cat[:clo]
    lh = cat[clo:]
    y = ll + hl + b_l_ref[...]
    y_l_ref[0] = jnp.maximum(y, 0.0).astype(y_l_ref.dtype)
    l2h_ref[0] = lh.astype(l2h_ref.dtype)


def _high_branch_kernel(pat_h_ref, up_ref, w_hh_ref, b_h_ref, y_h_ref):
    """High-frequency output for one (batch, HW-tile).

    pat_h_ref : (1, 9*Chi, T)    bf16 im2col of X_h
    up_ref    : (1, Cho, T)      bf16 upsampled scale_h*l2h(X_l)
    w_hh_ref  : (Cho, 9*Chi)     bf16 scale_h*w_h2h
    b_h_ref   : (Cho, 1)         f32 folded BN bias
    """
    hh = jnp.dot(w_hh_ref[...], pat_h_ref[0],
                 preferred_element_type=jnp.float32)
    y = hh + up_ref[0].astype(jnp.float32) + b_h_ref[...]
    y_h_ref[0] = jnp.maximum(y, 0.0).astype(y_h_ref.dtype)


# ---------------------------------------------------------------------------
# Layout plumbing helpers (gathers / pads / tiny weight folds only)
# ---------------------------------------------------------------------------
def _round_up(n, m):
    return ((n + m - 1) // m) * m


def _pad_lanes(a, n_target):
    n = a.shape[-1]
    if n_target == n:
        return a
    pad = [(0, 0)] * (a.ndim - 1) + [(0, n_target - n)]
    return jnp.pad(a, pad)


def _im2col_3x3(x, pad=1):
    """(B, C, H, W) -> (B, 9*C, H*W); slab order (kh, kw) major, channel minor."""
    b, c, h, w = x.shape
    xp = jnp.pad(x, ((0, 0), (0, 0), (pad, pad), (pad, pad)))
    slabs = []
    for kh in range(3):
        for kw in range(3):
            slabs.append(xp[:, :, kh:kh + h, kw:kw + w].reshape(b, c, h * w))
    return jnp.concatenate(slabs, axis=1)


def _avgpool2(x):
    b, c, h, w = x.shape
    return x.reshape(b, c, h // 2, 2, w // 2, 2).mean(axis=(3, 5))


def _flatten_weight(w):
    """(Cout, Cin, 3, 3) -> (Cout, 9*Cin), matching _im2col_3x3 ordering."""
    co, ci, kh, kw = w.shape
    return w.transpose(0, 2, 3, 1).reshape(co, kh * kw * ci)


def _fold_bn(gamma, beta, mean, var, eps):
    scale = gamma / jnp.sqrt(var + eps)
    bias = beta - mean * scale
    return (scale.reshape(-1, 1).astype(jnp.float32),
            bias.reshape(-1, 1).astype(jnp.float32))


def _tile_from_budget(n, per_lane_bytes, budget_bytes=16 * 2**20, max_tile=2048):
    """Largest multiple-of-128 divisor of n whose double-buffered tiles fit
    the VMEM budget (n is already a multiple of 128)."""
    t = budget_bytes // (2 * max(per_lane_bytes, 1))
    t = max(128, min(t, max_tile, n))
    t = (t // 128) * 128
    while n % t:
        t -= 128
    return t


_VMEM_LIMIT = 48 * 1024 * 1024   # above the 32 MiB default, below v7x's 64 MiB


# ---------------------------------------------------------------------------
# OctaveCBR forward
# ---------------------------------------------------------------------------
def octave_cbr(x_h, x_l, w_h2h, w_l2h, w_l2l, w_h2l, bn_h, bn_l, eps=1e-5):
    b, chi, h, w = x_h.shape
    _, cli, hl_, wl_ = x_l.shape
    cho = w_h2h.shape[0]
    clo = w_l2l.shape[0]
    assert (hl_, wl_) == (h // 2, w // 2)

    hwh, hwl = h * w, hl_ * wl_
    nh, nl = _round_up(hwh, 128), _round_up(hwl, 128)     # lane-dense layout

    out_dtype = x_h.dtype
    cdt = jnp.bfloat16                                    # MXU operand dtype
    out_bytes = jnp.dtype(out_dtype).itemsize

    # --- wrapper-side prep (layout + one cheap avg-pool pass, no conv math) --
    x_hp = _avgpool2(x_h)                                 # (B, Chi, H/2, W/2)
    pat_h = _pad_lanes(_im2col_3x3(x_h), nh).astype(cdt)      # (B, 9*Chi, Nh)
    pat_l = _pad_lanes(_im2col_3x3(x_l), nl).astype(cdt)      # (B, 9*Cli, Nl)
    pat_hp = _pad_lanes(_im2col_3x3(x_hp), nl).astype(cdt)    # (B, 9*Chi, Nl)

    # --- BN fold: scale folded into weight rows (f32), then cast to bf16 ----
    s_h, b_h = _fold_bn(*bn_h, eps)
    s_l, b_l = _fold_bn(*bn_l, eps)
    w_ll = (_flatten_weight(w_l2l) * s_l).astype(cdt)
    w_lh = (_flatten_weight(w_l2h) * s_h).astype(cdt)   # scale_h commutes with upsample+sum
    w_hl = (_flatten_weight(w_h2l) * s_l).astype(cdt)
    w_hh = (_flatten_weight(w_h2h) * s_h).astype(cdt)
    w_lcat = jnp.concatenate([w_ll, w_lh], axis=0)       # shared RHS -> one matmul

    # --- HW tile sizes from a VMEM budget (double-buffered) -----------------
    lane_bytes_low = (9 * cli + 9 * chi) * 2 + clo * out_bytes + cho * 2
    lane_bytes_high = 9 * chi * 2 + cho * 2 + cho * out_bytes
    tnl = _tile_from_budget(nl, lane_bytes_low)
    tnh = _tile_from_budget(nh, lane_bytes_high)

    # --- kernel 1: low branch (l2l + h2l -> BN -> ReLU) and raw l2h ---------
    y_l, l2h_low = pl.pallas_call(
        functools.partial(_low_branch_kernel, clo=clo),
        out_shape=(
            jax.ShapeDtypeStruct((b, clo, nl), out_dtype),
            jax.ShapeDtypeStruct((b, cho, nl), cdt),
        ),
        grid_spec=pltpu.PrefetchScalarGridSpec(
            num_scalar_prefetch=0,
            grid=(b, nl // tnl),
            in_specs=[
                pl.BlockSpec((1, 9 * cli, tnl), lambda i, n: (i, 0, n)),
                pl.BlockSpec((1, 9 * chi, tnl), lambda i, n: (i, 0, n)),
                pl.BlockSpec((clo + cho, 9 * cli), lambda i, n: (0, 0)),
                pl.BlockSpec((clo, 9 * chi), lambda i, n: (0, 0)),
                pl.BlockSpec((clo, 1), lambda i, n: (0, 0)),
            ],
            out_specs=[
                pl.BlockSpec((1, clo, tnl), lambda i, n: (i, 0, n)),
                pl.BlockSpec((1, cho, tnl), lambda i, n: (i, 0, n)),
            ],
        ),
        compiler_params=pltpu.CompilerParams(
            dimension_semantics=("parallel", "parallel"),
            vmem_limit_bytes=_VMEM_LIMIT),
    )(pat_l, pat_hp, w_lcat, w_hl, b_l)

    # nearest-neighbour 2x upsample of the (bf16) l2h pre-activation
    l2h_img = l2h_low[..., :hwl].reshape(b, cho, hl_, wl_)
    l2h_up = jnp.repeat(jnp.repeat(l2h_img, 2, axis=2), 2, axis=3)
    l2h_up = _pad_lanes(l2h_up.reshape(b, cho, hwh), nh)          # bf16

    # --- kernel 2: high branch (h2h + upsampled l2h -> BN -> ReLU) ----------
    y_h = pl.pallas_call(
        _high_branch_kernel,
        out_shape=jax.ShapeDtypeStruct((b, cho, nh), out_dtype),
        grid_spec=pltpu.PrefetchScalarGridSpec(
            num_scalar_prefetch=0,
            grid=(b, nh // tnh),
            in_specs=[
                pl.BlockSpec((1, 9 * chi, tnh), lambda i, n: (i, 0, n)),
                pl.BlockSpec((1, cho, tnh), lambda i, n: (i, 0, n)),
                pl.BlockSpec((cho, 9 * chi), lambda i, n: (0, 0)),
                pl.BlockSpec((cho, 1), lambda i, n: (0, 0)),
            ],
            out_specs=pl.BlockSpec((1, cho, tnh), lambda i, n: (i, 0, n)),
        ),
        compiler_params=pltpu.CompilerParams(
            dimension_semantics=("parallel", "parallel"),
            vmem_limit_bytes=_VMEM_LIMIT),
    )(pat_h, l2h_up, w_hh, b_h)

    x_h_out = y_h[..., :hwh].reshape(b, cho, h, w)
    x_l_out = y_l[..., :hwl].reshape(b, clo, hl_, wl_)
    return x_h_out, x_l_out


# ---------------------------------------------------------------------------
# Pure-JAX reference (for the correctness check only)
# ---------------------------------------------------------------------------
def _reference(x_h, x_l, w_h2h, w_l2h, w_l2l, w_h2l, bn_h, bn_l, eps=1e-5):
    def conv3x3(x, w):
        return lax.conv_general_dilated(
            x, w, window_strides=(1, 1), padding=((1, 1), (1, 1)),
            dimension_numbers=("NCHW", "OIHW", "NCHW"),
            precision=lax.Precision.HIGHEST)

    def upsample2(x):
        return jnp.repeat(jnp.repeat(x, 2, axis=2), 2, axis=3)

    def bn_relu(x, p):
        g, bta, m, v = p
        xn = (x - m[None, :, None, None]) / jnp.sqrt(
            v[None, :, None, None] + eps)
        return jnp.maximum(
            xn * g[None, :, None, None] + bta[None, :, None, None], 0.0)

    x_h2l = _avgpool2(x_h)
    x_h2h = conv3x3(x_h, w_h2h)
    x_l2h = upsample2(conv3x3(x_l, w_l2h))
    x_l2l = conv3x3(x_l, w_l2l)
    x_h2l = conv3x3(x_h2l, w_h2l)
    out_h = bn_relu(x_l2h + x_h2h, bn_h)
    out_l = bn_relu(x_h2l + x_l2l, bn_l)
    return out_h, out_l


if __name__ == "__main__":
    key = jax.random.PRNGKey(0)
    ks = jax.random.split(key, 16)

    B, C_IN, C_OUT, H, W = 2, 4, 8, 16, 16
    ALPHA = 0.5
    cli = int(ALPHA * C_IN)
    chi = C_IN - cli
    clo = int(ALPHA * C_OUT)
    cho = C_OUT - clo

    x_h = jax.random.normal(ks[0], (B, chi, H, W), jnp.float32)
    x_l = jax.random.normal(ks[1], (B, cli, H // 2, W // 2), jnp.float32)

    wstd = 0.1
    w_h2h = wstd * jax.random.normal(ks[2], (cho, chi, 3, 3), jnp.float32)
    w_l2h = wstd * jax.random.normal(ks[3], (cho, cli, 3, 3), jnp.float32)
    w_l2l = wstd * jax.random.normal(ks[4], (clo, cli, 3, 3), jnp.float32)
    w_h2l = wstd * jax.random.normal(ks[5], (clo, chi, 3, 3), jnp.float32)

    bn_h = (1.0 + 0.1 * jax.random.normal(ks[6], (cho,), jnp.float32),    # gamma
            0.1 * jax.random.normal(ks[7], (cho,), jnp.float32),          # beta
            0.1 * jax.random.normal(ks[8], (cho,), jnp.float32),          # mean
            0.5 + jnp.abs(jax.random.normal(ks[9], (cho,), jnp.float32)))   # var
    bn_l = (1.0 + 0.1 * jax.random.normal(ks[10], (clo,), jnp.float32),
            0.1 * jax.random.normal(ks[11], (clo,), jnp.float32),
            0.1 * jax.random.normal(ks[12], (clo,), jnp.float32),
            0.5 + jnp.abs(jax.random.normal(ks[13], (clo,), jnp.float32)))

    out_h, out_l = octave_cbr(x_h, x_l, w_h2h, w_l2h, w_l2l, w_h2l, bn_h, bn_l)
    jax.block_until_ready((out_h, out_l))

    ref_h, ref_l = _reference(x_h, x_l, w_h2h, w_l2h, w_l2l, w_h2l, bn_h, bn_l)
    assert out_h.shape == (B, cho, H, W)
    assert out_l.shape == (B, clo, H // 2, W // 2)
    # bf16 MXU operands (f32 accumulation) -> bf16-appropriate tolerance.
    assert jnp.allclose(out_h, ref_h, atol=2e-2, rtol=2e-2), "high-branch mismatch"
    assert jnp.allclose(out_l, ref_l, atol=2e-2, rtol=2e-2), "low-branch mismatch"
    print("KERNEL_OK")
</pallas_src>

<mosaic_0001>
module attributes {stable_mosaic.version = 11 : i64} {
  func.func @_low_branch_kernel(%arg0: i32, %arg1: i32, %arg2: memref<1x18x128xbf16, #tpu.memory_space<vmem>>, %arg3: memref<1x18x128xbf16, #tpu.memory_space<vmem>>, %arg4: memref<8x18xbf16, #tpu.memory_space<vmem>>, %arg5: memref<4x18xbf16, #tpu.memory_space<vmem>>, %arg6: memref<4x1xf32, #tpu.memory_space<vmem>>, %arg7: memref<1x4x128xf32, #tpu.memory_space<vmem>>, %arg8: memref<1x4x128xbf16, #tpu.memory_space<vmem>>) attributes {dimension_semantics = [#tpu.dimension_semantics<parallel>, #tpu.dimension_semantics<parallel>], iteration_bounds = array<i64: 2, 1>, scalar_prefetch = 0 : i64, scratch_operands = 0 : i64, tpu.core_type = #tpu.core_type<tc>, window_params = [{transform_indices = @transform_0, window_bounds = array<i64: 1, 18, 128>}, {transform_indices = @transform_1, window_bounds = array<i64: 1, 18, 128>}, {pipeline_mode = #tpu.pipeline_mode<synchronous>, transform_indices = @transform_2, window_bounds = array<i64: 8, 18>}, {pipeline_mode = #tpu.pipeline_mode<synchronous>, transform_indices = @transform_3, window_bounds = array<i64: 4, 18>}, {pipeline_mode = #tpu.pipeline_mode<synchronous>, transform_indices = @transform_4, window_bounds = array<i64: 4, 1>}, {transform_indices = @transform_5, window_bounds = array<i64: 1, 4, 128>}, {transform_indices = @transform_6, window_bounds = array<i64: 1, 4, 128>}]} {
    %c0 = arith.constant 0 : index
    %c0_0 = arith.constant 0 : index
    %0 = vector.load %arg4[%c0, %c0_0] : memref<8x18xbf16, #tpu.memory_space<vmem>>, vector<8x18xbf16>
    %c0_1 = arith.constant 0 : index
    %c0_2 = arith.constant 0 : index
    %c0_3 = arith.constant 0 : index
    %1 = vector.load %arg2[%c0_1, %c0_2, %c0_3] : memref<1x18x128xbf16, #tpu.memory_space<vmem>>, vector<1x18x128xbf16>
    %2 = vector.shape_cast %1 : vector<1x18x128xbf16> to vector<18x128xbf16>
    %cst = arith.constant dense<0.000000e+00> : vector<8x128xf32>
    %3 = tpu.matmul %0, %2, %cst {dimension_numbers = #tpu.dot_dimension_numbers<[1], [0], [0], [1], [0, 0, 1, 1], [], []>} : vector<8x18xbf16>, vector<18x128xbf16>, vector<8x128xf32> -> vector<8x128xf32>
    %c0_4 = arith.constant 0 : index
    %c0_5 = arith.constant 0 : index
    %4 = vector.load %arg5[%c0_4, %c0_5] : memref<4x18xbf16, #tpu.memory_space<vmem>>, vector<4x18xbf16>
    %c0_6 = arith.constant 0 : index
    %c0_7 = arith.constant 0 : index
    %c0_8 = arith.constant 0 : index
    %5 = vector.load %arg3[%c0_6, %c0_7, %c0_8] : memref<1x18x128xbf16, #tpu.memory_space<vmem>>, vector<1x18x128xbf16>
    %6 = vector.shape_cast %5 : vector<1x18x128xbf16> to vector<18x128xbf16>
    %cst_9 = arith.constant dense<0.000000e+00> : vector<4x128xf32>
    %7 = tpu.matmul %4, %6, %cst_9 {dimension_numbers = #tpu.dot_dimension_numbers<[1], [0], [0], [1], [0, 0, 1, 1], [], []>} : vector<4x18xbf16>, vector<18x128xbf16>, vector<4x128xf32> -> vector<4x128xf32>
    %8 = vector.extract_strided_slice %3 {offsets = [0, 0], sizes = [4, 128], strides = [1, 1]} : vector<8x128xf32> to vector<4x128xf32>
    %9 = vector.extract_strided_slice %3 {offsets = [4, 0], sizes = [4, 128], strides = [1, 1]} : vector<8x128xf32> to vector<4x128xf32>
    %10 = arith.addf %8, %7 : vector<4x128xf32>
    %c0_10 = arith.constant 0 : index
    %c0_11 = arith.constant 0 : index
    %11 = vector.load %arg6[%c0_10, %c0_11] : memref<4x1xf32, #tpu.memory_space<vmem>>, vector<4x1xf32>
    %12 = vector.broadcast %11 : vector<4x1xf32> to vector<4x128xf32>
    %13 = arith.addf %10, %12 : vector<4x128xf32>
    %cst_12 = arith.constant 0.000000e+00 : f32
    %14 = vector.broadcast %cst_12 : f32 to vector<4x128xf32>
    %15 = arith.maximumf %13, %14 : vector<4x128xf32>
    %c0_13 = arith.constant 0 : index
    %c0_14 = arith.constant 0 : index
    %c0_15 = arith.constant 0 : index
    %16 = vector.load %arg7[%c0_13, %c0_14, %c0_15] : memref<1x4x128xf32, #tpu.memory_space<vmem>>, vector<1x4x128xf32>
    %17 = vector.shape_cast %16 : vector<1x4x128xf32> to vector<4x128xf32>
    %18 = vector.shape_cast %15 : vector<4x128xf32> to vector<1x4x128xf32>
    tpu.vector_store %arg7[%c0_13, %c0_14, %c0_15], %18 {strides = array<i32>} : memref<1x4x128xf32, #tpu.memory_space<vmem>>, vector<1x4x128xf32>,
    %19 = arith.truncf %9 : vector<4x128xf32> to vector<4x128xbf16>
    %c0_16 = arith.constant 0 : index
    %c0_17 = arith.constant 0 : index
    %c0_18 = arith.constant 0 : index
    %20 = vector.load %arg8[%c0_16, %c0_17, %c0_18] : memref<1x4x128xbf16, #tpu.memory_space<vmem>>, vector<1x4x128xbf16>
    %21 = vector.shape_cast %20 : vector<1x4x128xbf16> to vector<4x128xbf16>
    %22 = vector.shape_cast %19 : vector<4x128xbf16> to vector<1x4x128xbf16>
    tpu.vector_store %arg8[%c0_16, %c0_17, %c0_18], %22 {strides = array<i32>} : memref<1x4x128xbf16, #tpu.memory_space<vmem>>, vector<1x4x128xbf16>,
    return
  }
  func.func @transform_0(%arg0: i32, %arg1: i32) -> (i32, i32, i32) {
    %c0_i32 = arith.constant 0 : i32
    %c0_i32_0 = arith.constant 0 : i32
    return %arg0, %c0_i32, %arg1 : i32, i32, i32
  }
  func.func @transform_1(%arg0: i32, %arg1: i32) -> (i32, i32, i32) {
    %c0_i32 = arith.constant 0 : i32
    %c0_i32_0 = arith.constant 0 : i32
    return %arg0, %c0_i32, %arg1 : i32, i32, i32
  }
  func.func @transform_2(%arg0: i32, %arg1: i32) -> (i32, i32) {
    %c0_i32 = arith.constant 0 : i32
    %c0_i32_0 = arith.constant 0 : i32
    %c0_i32_1 = arith.constant 0 : i32
    return %c0_i32, %c0_i32_0 : i32, i32
  }
  func.func @transform_3(%arg0: i32, %arg1: i32) -> (i32, i32) {
    %c0_i32 = arith.constant 0 : i32
    %c0_i32_0 = arith.constant 0 : i32
    %c0_i32_1 = arith.constant 0 : i32
    return %c0_i32, %c0_i32_0 : i32, i32
  }
  func.func @transform_4(%arg0: i32, %arg1: i32) -> (i32, i32) {
    %c0_i32 = arith.constant 0 : i32
    %c0_i32_0 = arith.constant 0 : i32
    %c0_i32_1 = arith.constant 0 : i32
    return %c0_i32, %c0_i32_0 : i32, i32
  }
  func.func @transform_5(%arg0: i32, %arg1: i32) -> (i32, i32, i32) {
    %c0_i32 = arith.constant 0 : i32
    %c0_i32_0 = arith.constant 0 : i32
    return %arg0, %c0_i32, %arg1 : i32, i32, i32
  }
  func.func @transform_6(%arg0: i32, %arg1: i32) -> (i32, i32, i32) {
    %c0_i32 = arith.constant 0 : i32
    %c0_i32_0 = arith.constant 0 : i32
    return %arg0, %c0_i32, %arg1 : i32, i32, i32
  }
}

</mosaic_0001>

<llo_original>
// kernel: tpu_custom_call.1
$region0: #{tpu_custom_call.1}
  #allocation0 [shape = 'u32[]', space=smem, size = 0x4, offset = 0x4, fixed_abs, tag = 'smem constant byte address 0x4 - core index']
  #allocation1 [shape = 'u32[144,128]{1,0:T(1,128)}', space=vmem, size = 0x12000, scoped, tag = 'internal scratch']
  %s0 = inlined_call_operand.vmem [shape: bf16[2,18,128], index: 0, kind: input, shape index: {}]
  %s1 = inlined_call_operand.vmem [shape: bf16[2,18,128], index: 1, kind: input, shape index: {}]
  %s2 = inlined_call_operand.vmem [shape: bf16[8,18], index: 2, kind: input, shape index: {}]
  %s3 = inlined_call_operand.vmem [shape: bf16[4,18], index: 3, kind: input, shape index: {}]
  %s4 = inlined_call_operand.vmem [shape: f32[4,1], index: 4, kind: input, shape index: {}]
  %s5 = inlined_call_operand.hbm [shape: f32[2,4,128], index: 5, kind: output, shape index: {0}]
  %s6 = inlined_call_operand.hbm [shape: bf16[2,4,128], index: 6, kind: output, shape index: {1}]
  %7 = xla_tuple %s5, %s6
  %s8 = sld [smem:[#allocation0]]
  $region61: #{tpu_custom_call.1} parent=0
    _
  %s10 = ssub.s32 1, %s8
  %s11 = scalar_select 0, %s10, %s8
  $region1: #{tpu_custom_call.1} parent=0
    #allocation2 [shape = 'u8[4096]{0}', space=vmem, size = 0x1000, scoped, tag = 'output window, operand 0']
    #allocation3 [shape = 's32[2]{0}', space=sflag, size = 0x8, scoped, tag = 'scoped memory for tpu_custom_call.1']
    #allocation4 [shape = 'u8[2048]{0}', space=vmem, size = 0x800, scoped, tag = 'output window, operand 1']
    #allocation5 [shape = 's32[2]{0}', space=sflag, size = 0x8, scoped, tag = 'scoped memory for tpu_custom_call.1']
    %12 = vsyncpa [#allocation3], 0
    %s13 = scalar_lea.sflag [#allocation3], 1
    %14 = vsyncpa %s13, 0
    %15 = vsyncpa [#allocation5], 0
    %s16 = scalar_lea.sflag [#allocation5], 1
    %17 = vsyncpa %s16, 0
    loop: start=0, step=1, limit=4
    $region2: #{tpu_custom_call.1} parent=1 // loop_pre_header
      _
    $region3: #{tpu_custom_call.1} parent=1 // loop_header
      %s19 = sphi 0, %s23
      %p20 = scmp.ge.s32.totalorder %s19, 4
      %s26 = sphi 0, %s38
      %s27 = sphi 0, %s34
      %s28 = sphi 0, %s26
      %s29 = sphi 0, %s27
      %s30 = sphi 0, %s28
      %s31 = sphi 0, %s29
      %s43 = sphi 0, %s45
      %s46 = sphi 0, %s43
      %s47 = sphi 0, %s46
      %s63 = sphi 0, %s47
      %s71 = sphi 0, %s73
      %s74 = sphi 0, %s71
      %s75 = sphi 0, %s74
      %s91 = sphi 0, %s75
      %s95 = sphi 0, %s95
      %s97 = sphi 0, %s95
      %s98 = sphi 0, %s97
      %s112 = sphi 0, %s98
      %s116 = sphi 0, %s116
      %s118 = sphi 0, %s116
      %s119 = sphi 0, %s118
      %s133 = sphi 0, %s119
      %s137 = sphi 0, %s137
      %s139 = sphi 0, %s137
      %s140 = sphi 0, %s139
      %s154 = sphi 0, %s140
      %s162 = sphi 0, %s164
      %s165 = sphi 0, %s162
      %s166 = sphi 0, %s165
      %s182 = sphi 0, %s166
      %s190 = sphi 0, %s192
      %s193 = sphi 0, %s190
      %s194 = sphi 0, %s193
      %s210 = sphi 0, %s194
    $region4: #{tpu_custom_call.1} parent=1 // loop_header_branch
      %22 = sbr.rel (%p20) target = $region8
    $region5: #{tpu_custom_call.1} parent=1 // loop_body
      %s24 = ssub.s32 %s19, 1
      %s25 = ssub.s32 %s19, 2
      %s32 = sadd.s32 1, %s27
      %p33 = scmp.ge.s32.totalorder %s32, 1
      %s34 = scalar_select %p33, 0, %s32
      %s35 = sadd.s32 1, %s26
      %s36 = scalar_select %p33, %s35, %s26
      %p37 = scmp.ge.s32.totalorder %s36, 2
      %s38 = scalar_select %p37, 0, %s36
      %s39 = ssub.s32 %s26, %s38
      %s40 = ssub.s32 %s27, %s34
      %s41 = sor.u32 %s39, %s40
      %p42 = scmp.eq.s32.totalorder %s41, 0
      %s44 = sadd.s32 %s43, 1
      %s45 = scalar_select %p42, %s43, %s44
      %p48 = pneg %p42
      %p49 = scmp.eq.s32.totalorder %s19, 1
      %p50 = por %p48, %p49
      %p51 = scmp.ne.s32.totalorder %s43, %s46
      %p52 = scmp.eq.s32.totalorder %s19, 0
      %p53 = por %p51, %p52
      %p54 = scmp.ne.s32.totalorder %s43, %s46
      %p55 = scmp.eq.s32.totalorder %s24, 1
      %p56 = por %p54, %p55
      %p57 = scmp.ne.s32.totalorder %s46, %s47
      %p58 = scmp.eq.s32.totalorder %s24, 0
      %p59 = por %p57, %p58
      %p60 = scmp.ne.s32.totalorder %s46, %s47
      %p61 = scmp.eq.s32.totalorder %s25, 1
      %p62 = por %p60, %p61
      %p64 = scmp.ne.s32.totalorder %s47, %s63
      %p65 = scmp.eq.s32.totalorder %s25, 0
      %p66 = por %p64, %p65
      %s67 = ssub.s32 %s26, %s38
      %s68 = ssub.s32 %s27, %s34
      %s69 = sor.u32 %s67, %s68
      %p70 = scmp.eq.s32.totalorder %s69, 0
      %s72 = sadd.s32 %s71, 1
      %s73 = scalar_select %p70, %s71, %s72
      %p76 = pneg %p70
      %p77 = scmp.eq.s32.totalorder %s19, 1
      %p78 = por %p76, %p77
      %p79 = scmp.ne.s32.totalorder %s71, %s74
      %p80 = scmp.eq.s32.totalorder %s19, 0
      %p81 = por %p79, %p80
      %p82 = scmp.ne.s32.totalorder %s71, %s74
      %p83 = scmp.eq.s32.totalorder %s24, 1
      %p84 = por %p82, %p83
      %p85 = scmp.ne.s32.totalorder %s74, %s75
      %p86 = scmp.eq.s32.totalorder %s24, 0
      %p87 = por %p85, %p86
      %p88 = scmp.ne.s32.totalorder %s74, %s75
      %p89 = scmp.eq.s32.totalorder %s25, 1
      %p90 = por %p88, %p89
      %p92 = scmp.ne.s32.totalorder %s75, %s91
      %p93 = scmp.eq.s32.totalorder %s25, 0
      %p94 = por %p92, %p93
      %s96 = sadd.s32 %s95, 1
      %p99 = scmp.eq.s32.totalorder %s19, 1
      %p100 = scmp.ne.s32.totalorder %s95, %s97
      %p101 = scmp.eq.s32.totalorder %s19, 0
      %p102 = por %p100, %p101
      %p103 = scmp.ne.s32.totalorder %s95, %s97
      %p104 = scmp.eq.s32.totalorder %s24, 1
      %p105 = por %p103, %p104
      %p106 = scmp.ne.s32.totalorder %s97, %s98
      %p107 = scmp.eq.s32.totalorder %s24, 0
      %p108 = por %p106, %p107
      %p109 = scmp.ne.s32.totalorder %s97, %s98
      %p110 = scmp.eq.s32.totalorder %s25, 1
      %p111 = por %p109, %p110
      %p113 = scmp.ne.s32.totalorder %s98, %s112
      %p114 = scmp.eq.s32.totalorder %s25, 0
      %p115 = por %p113, %p114
      %s117 = sadd.s32 %s116, 1
      %p120 = scmp.eq.s32.totalorder %s19, 1
      %p121 = scmp.ne.s32.totalorder %s116, %s118
      %p122 = scmp.eq.s32.totalorder %s19, 0
      %p123 = por %p121, %p122
      %p124 = scmp.ne.s32.totalorder %s116, %s118
      %p125 = scmp.eq.s32.totalorder %s24, 1
      %p126 = por %p124, %p125
      %p127 = scmp.ne.s32.totalorder %s118, %s119
      %p128 = scmp.eq.s32.totalorder %s24, 0
      %p129 = por %p127, %p128
      %p130 = scmp.ne.s32.totalorder %s118, %s119
      %p131 = scmp.eq.s32.totalorder %s25, 1
      %p132 = por %p130, %p131
      %p134 = scmp.ne.s32.totalorder %s119, %s133
      %p135 = scmp.eq.s32.totalorder %s25, 0
      %p136 = por %p134, %p135
      %s138 = sadd.s32 %s137, 1
      %p141 = scmp.eq.s32.totalorder %s19, 1
      %p142 = scmp.ne.s32.totalorder %s137, %s139
      %p143 = scmp.eq.s32.totalorder %s19, 0
      %p144 = por %p142, %p143
      %p145 = scmp.ne.s32.totalorder %s137, %s139
      %p146 = scmp.eq.s32.totalorder %s24, 1
      %p147 = por %p145, %p146
      %p148 = scmp.ne.s32.totalorder %s139, %s140
      %p149 = scmp.eq.s32.totalorder %s24, 0
      %p150 = por %p148, %p149
      %p151 = scmp.ne.s32.totalorder %s139, %s140
      %p152 = scmp.eq.s32.totalorder %s25, 1
      %p153 = por %p151, %p152
      %p155 = scmp.ne.s32.totalorder %s140, %s154
      %p156 = scmp.eq.s32.totalorder %s25, 0
      %p157 = por %p155, %p156
      %s158 = ssub.s32 %s26, %s38
      %s159 = ssub.s32 %s27, %s34
      %s160 = sor.u32 %s158, %s159
      %p161 = scmp.eq.s32.totalorder %s160, 0
      %s163 = sadd.s32 %s162, 1
      %s164 = scalar_select %p161, %s162, %s163
      %p167 = pneg %p161
      %p168 = scmp.eq.s32.totalorder %s19, 1
      %p169 = por %p167, %p168
      %p170 = scmp.ne.s32.totalorder %s162, %s165
      %p171 = scmp.eq.s32.totalorder %s19, 0
      %p172 = por %p170, %p171
      %p173 = scmp.ne.s32.totalorder %s162, %s165
      %p174 = scmp.eq.s32.totalorder %s24, 1
      %p175 = por %p173, %p174
      %p176 = scmp.ne.s32.totalorder %s165, %s166
      %p177 = scmp.eq.s32.totalorder %s24, 0
      %p178 = por %p176, %p177
      %p179 = scmp.ne.s32.totalorder %s165, %s166
      %p180 = scmp.eq.s32.totalorder %s25, 1
      %p181 = por %p179, %p180
      %p183 = scmp.ne.s32.totalorder %s166, %s182
      %p184 = scmp.eq.s32.totalorder %s25, 0
      %p185 = por %p183, %p184
      %s186 = ssub.s32 %s26, %s38
      %s187 = ssub.s32 %s27, %s34
      %s188 = sor.u32 %s186, %s187
      %p189 = scmp.eq.s32.totalorder %s188, 0
      %s191 = sadd.s32 %s190, 1
      %s192 = scalar_select %p189, %s190, %s191
      %p195 = pneg %p189
      %p196 = scmp.eq.s32.totalorder %s19, 1
      %p197 = por %p195, %p196
      %p198 = scmp.ne.s32.totalorder %s190, %s193
      %p199 = scmp.eq.s32.totalorder %s19, 0
      %p200 = por %p198, %p199
      %p201 = scmp.ne.s32.totalorder %s190, %s193
      %p202 = scmp.eq.s32.totalorder %s24, 1
      %p203 = por %p201, %p202
      %p204 = scmp.ne.s32.totalorder %s193, %s194
      %p205 = scmp.eq.s32.totalorder %s24, 0
      %p206 = por %p204, %p205
      %p207 = scmp.ne.s32.totalorder %s193, %s194
      %p208 = scmp.eq.s32.totalorder %s25, 1
      %p209 = por %p207, %p208
      %p211 = scmp.ne.s32.totalorder %s194, %s210
      %p212 = scmp.eq.s32.totalorder %s25, 0
      %p213 = por %p211, %p212
      %p214 = scmp.le.s32.totalorder 1, %s19
      %p215 = scmp.lt.s32.totalorder %s19, 3
      %p216 = pnand %p214, %p215
      %p217 = pneg %p216
      // Predicated region
      $region9: #{tpu_custom_call.1} parent=5 // pred_check
        _
      $region10: #{tpu_custom_call.1} parent=5 // pred_check_branch
        %219 = sbr.rel (%p216) target = $region12
      $region11: #{tpu_custom_call.1} parent=5 // pred_region
        %s220 = ssub.s32 %s19, 1
        // Predicated region
        $region13: #{tpu_custom_call.1} parent=11 // pred_check
          %p221 = pneg %p108
        $region14: #{tpu_custom_call.1} parent=11 // pred_check_branch
          %223 = sbr.rel (%p221) target = $region16
        $region15: #{tpu_custom_call.1} parent=11 // pred_region
          _
        $region16: #{tpu_custom_call.1} parent=11 // pred_fallthru
          _
        // Predicated region
        $region17: #{tpu_custom_call.1} parent=11 // pred_check
          %p224 = pneg %p129
        $region18: #{tpu_custom_call.1} parent=11 // pred_check_branch
          %226 = sbr.rel (%p224) target = $region20
        $region19: #{tpu_custom_call.1} parent=11 // pred_region
          _
        $region20: #{tpu_custom_call.1} parent=11 // pred_fallthru
          _
        // Predicated region
        $region21: #{tpu_custom_call.1} parent=11 // pred_check
          %p227 = pneg %p150
        $region22: #{tpu_custom_call.1} parent=11 // pred_check_branch
          %229 = sbr.rel (%p227) target = $region24
        $region23: #{tpu_custom_call.1} parent=11 // pred_region
          _
        $region24: #{tpu_custom_call.1} parent=11 // pred_fallthru
          _
      $region12: #{tpu_custom_call.1} parent=5 // pred_fallthru
        _
      %p230 = scmp.lt.s32.totalorder %s19, 2
      // Predicated region
      $region25: #{tpu_custom_call.1} parent=5 // pred_check
        %p231 = pneg %p230
      $region26: #{tpu_custom_call.1} parent=5 // pred_check_branch
        %233 = sbr.rel (%p231) target = $region28
      $region27: #{tpu_custom_call.1} parent=5 // pred_region
        // Predicated region
        $region29: #{tpu_custom_call.1} parent=27 // pred_check
          %p234 = pneg %p53
        $region30: #{tpu_custom_call.1} parent=27 // pred_check_branch
          %236 = sbr.rel (%p234) target = $region32
        $region31: #{tpu_custom_call.1} parent=27 // pred_region
          %p237 = scmp.lt.s32.totalorder %s26, 1
          %s238 = scalar_select %p237, %s26, 1
          %p239 = scmp.lt.s32.totalorder %s27, 0
          %s240 = scalar_select %p239, %s27, 0
          %s241 = smul.addr %s238, 3
          %s242 = sadd.s32 %s240, %s241
          %s243 = smul.addr %s242, 4
          %s244 = scalar_lea.vmem %s0, %s243
        $region32: #{tpu_custom_call.1} parent=27 // pred_fallthru
          _
        // Predicated region
        $region33: #{tpu_custom_call.1} parent=27 // pred_check
          %p245 = pneg %p81
        $region34: #{tpu_custom_call.1} parent=27 // pred_check_branch
          %247 = sbr.rel (%p245) target = $region36
        $region35: #{tpu_custom_call.1} parent=27 // pred_region
          %p248 = scmp.lt.s32.totalorder %s26, 1
          %s249 = scalar_select %p248, %s26, 1
          %p250 = scmp.lt.s32.totalorder %s27, 0
          %s251 = scalar_select %p250, %s27, 0
          %s252 = smul.addr %s249, 3
          %s253 = sadd.s32 %s251, %s252
          %s254 = smul.addr %s253, 4
          %s255 = scalar_lea.vmem %s1, %s254
        $region36: #{tpu_custom_call.1} parent=27 // pred_fallthru
          _
      $region28: #{tpu_custom_call.1} parent=5 // pred_fallthru
        _
      %p256 = scmp.le.s32.totalorder 1, %s19
      %p257 = scmp.lt.s32.totalorder %s19, 3
      %p258 = pnand %p256, %p257
      %p259 = pneg %p258
      // Predicated region
      $region37: #{tpu_custom_call.1} parent=5 // pred_check
        _
      $region38: #{tpu_custom_call.1} parent=5 // pred_check_branch
        %261 = sbr.rel (%p258) target = $region40
      $region39: #{tpu_custom_call.1} parent=5 // pred_region
        %s262 = ssub.s32 %s19, 1
        %p263 = scmp.lt.s32.totalorder %s28, 1
        %s264 = scalar_select %p263, %s28, 1
        %p265 = scmp.lt.s32.totalorder %s29, 0
        %s266 = scalar_select %p265, %s29, 0
        %s267 = smul.addr %s264, 3
        %s268 = sadd.s32 %s266, %s267
        %s269 = smul.addr %s268, 4
        %s270 = scalar_lea.vmem %s0, %s269
        %p271 = pneg %p59
        %p272 = pneg %p56
        %p273 = scmp.lt.s32.totalorder %s28, 1
        %s274 = scalar_select %p273, %s28, 1
        %p275 = scmp.lt.s32.totalorder %s29, 0
        %s276 = scalar_select %p275, %s29, 0
        %s277 = smul.addr %s274, 3
        %s278 = sadd.s32 %s276, %s277
        %s279 = smul.addr %s278, 4
        %s280 = scalar_lea.vmem %s1, %s279
        %p281 = pneg %p87
        %p282 = pneg %p84
        %p283 = pneg %p108
        %p284 = pneg %p105
        %p285 = pneg %p129
        %p286 = pneg %p126
        %p287 = pneg %p150
        %p288 = pneg %p147
        %p289 = pneg %p178
        %p290 = pneg %p175
        %s291 = sand.u32 %s165, 1
        %s292 = scalar_lea.sflag [#allocation3], %s291
        %s293 = sand.u32 %s165, 1
        %s294 = smul.addr %s293, 4
        %s295 = scalar_lea.vmem [#allocation2], %s294
        %p296 = pneg %p206
        %p297 = pneg %p203
        %s298 = sand.u32 %s193, 1
        %s299 = scalar_lea.sflag [#allocation5], %s298
        %s300 = sand.u32 %s193, 1
        %s301 = smul.addr %s300, 2
        %s302 = scalar_lea.vmem [#allocation4], %s301
        %p303 = scmp.lt.s32.totalorder %s28, 1
        %s304 = scalar_select %p303, %s28, 1
        %p305 = scmp.lt.s32.totalorder %s29, 0
        %s306 = scalar_select %p305, %s29, 0
        %s307 = smul.addr %s304, 3
        %s308 = sadd.s32 %s306, %s307
        %s309 = smul.addr %s308, 4
        %s310 = scalar_lea.vmem %s0, %s309
        %p311 = scmp.lt.s32.totalorder %s28, 1
        %s312 = scalar_select %p311, %s28, 1
        %p313 = scmp.lt.s32.totalorder %s29, 0
        %s314 = scalar_select %p313, %s29, 0
        %s315 = smul.addr %s312, 3
        %s316 = sadd.s32 %s314, %s315
        %s317 = smul.addr %s316, 4
        %s318 = scalar_lea.vmem %s1, %s317
        %v320 = vld [vmem:[%s2] sm:$0xf]
        %v321 = vld [vmem:[%s310] sm:$0xf]
        %v322 = vld [vmem:[%s310 + $0x4] sm:$0xf]
        %v323 = vld [vmem:[%s310 + $0x8] sm:$0x1]
        %v327 = vunpack.c.l.b16 %v321
        %v328 = vunpack.c.l.b16 %v322
        %v329 = vunpack.c.l.b16 %v323
        %v330 = vpack.c.b16 %v328, %v327
        %v331 = vpack.c.b16 %v329, %v329
        %vm333 = vcmask 146432
        %v335 = vsel %vm333, %v320, 0
        %vm337 = vcmask 1040384
        %v339 = vsel %vm337, %v331, 0
        %341 = vmatprep.subr.bf16.mxu0 0
        %342 = vmatpush1.bf16.msra.mxu0 0
        %343 = vmatprep.subr.bf16.mxu0 0
        %344 = vmatpush1.bf16.msra.mxu0 0
        %345 = vmatprep.subr.bf16.mxu0 0
        %346 = vmatpush1.bf16.msra.mxu0 0
        %347 = vmatprep.subr.bf16.mxu0 0
        %348 = vmatpush1.bf16.msra.mxu0 0
        %349 = vmatprep.subr.bf16.mxu0 0
        %350 = vmatpush1.bf16.msra.mxu0 0
        %351 = vmatprep.subr.bf16.mxu0 0
        %352 = vmatpush1.bf16.msra.mxu0 0
        %353 = vmatprep.subr.bf16.mxu0 0
        %354 = vmatpush1.bf16.msra.mxu0 %v339
        %355 = vmatprep.subr.bf16.mxu0 0
        %356 = vmatpush1.bf16.msra.mxu0 %v330
        %357 = vmatprep.subr.bf16.mxu0 0
        %358 = vmatpush2.bf16.msra.mxu0 0
        %359 = vmatprep.subr.bf16.mxu0 0
        %360 = vmatpush2.bf16.msra.mxu0 0
        %361 = vmatprep.subr.bf16.mxu0 0
        %362 = vmatpush2.bf16.msra.mxu0 0
        %363 = vmatprep.subr.bf16.mxu0 0
        %364 = vmatpush2.bf16.msra.mxu0 0
        %365 = vmatprep.subr.bf16.mxu0 0
        %366 = vmatpush2.bf16.msra.mxu0 0
        %367 = vmatprep.subr.bf16.mxu0 0
        %368 = vmatpush2.bf16.msra.mxu0 0
        %369 = vmatprep.subr.bf16.mxu0 0
        %370 = vmatpush2.bf16.msra.mxu0 0
        %371 = vmatprep.subr.bf16.mxu0 0
        %372 = vmatpush2.bf16.msra.mxu0 0
        %373 = vmatprep.mubr.bf16.mxu0 0
        %374 = vmatmul.mubr.bf16.gmra.mxu0 %v335
        %v375 = vpop.f32.mrf.mxu0
        %v376 = vadd.f32 0.0, %v375
        %v377 = vpop.f32.mrf.mxu0
        %v378 = vpop.f32.mrf.mxu0
        %v379 = vpop.f32.mrf.mxu0
        %380 = vdwg.mxu0
        %v381 = vld [vmem:[%s3] sm:$0x3]
        %v382 = vld [vmem:[%s318] sm:$0xf]
        %v383 = vld [vmem:[%s318 + $0x4] sm:$0xf]
        %v384 = vld [vmem:[%s318 + $0x8] sm:$0x1]
        %v388 = vunpack.c.l.b16 %v382
        %v389 = vunpack.c.l.b16 %v383
        %v390 = vunpack.c.l.b16 %v384
        %v391 = vpack.c.b16 %v389, %v388
        %v392 = vpack.c.b16 %v390, %v390
        %v395 = vsel %vm333, %v381, 0
        %v398 = vsel %vm337, %v392, 0
        %400 = vmatprep.subr.bf16.mxu0 0
        %401 = vmatpush1.bf16.msra.mxu0 0
        %402 = vmatprep.subr.bf16.mxu0 0
        %403 = vmatpush1.bf16.msra.mxu0 0
        %404 = vmatprep.subr.bf16.mxu0 0
        %405 = vmatpush1.bf16.msra.mxu0 0
        %406 = vmatprep.subr.bf16.mxu0 0
        %407 = vmatpush1.bf16.msra.mxu0 0
        %408 = vmatprep.subr.bf16.mxu0 0
        %409 = vmatpush1.bf16.msra.mxu0 0
        %410 = vmatprep.subr.bf16.mxu0 0
        %411 = vmatpush1.bf16.msra.mxu0 0
        %412 = vmatprep.subr.bf16.mxu0 0
        %413 = vmatpush1.bf16.msra.mxu0 %v398
        %414 = vmatprep.subr.bf16.mxu0 0
        %415 = vmatpush1.bf16.msra.mxu0 %v391
        %416 = vmatprep.subr.bf16.mxu0 0
        %417 = vmatpush2.bf16.msra.mxu0 0
        %418 = vmatprep.subr.bf16.mxu0 0
        %419 = vmatpush2.bf16.msra.mxu0 0
        %420 = vmatprep.subr.bf16.mxu0 0
        %421 = vmatpush2.bf16.msra.mxu0 0
        %422 = vmatprep.subr.bf16.mxu0 0
        %423 = vmatpush2.bf16.msra.mxu0 0
        %424 = vmatprep.subr.bf16.mxu0 0
        %425 = vmatpush2.bf16.msra.mxu0 0
        %426 = vmatprep.subr.bf16.mxu0 0
        %427 = vmatpush2.bf16.msra.mxu0 0
        %428 = vmatprep.subr.bf16.mxu0 0
        %429 = vmatpush2.bf16.msra.mxu0 0
        %430 = vmatprep.subr.bf16.mxu0 0
        %431 = vmatpush2.bf16.msra.mxu0 0
        %432 = vmatprep.mubr.bf16.mxu0 0
        %433 = vmatmul.mubr.bf16.gmra.mxu0 %v395
        %v434 = vpop.f32.mrf.mxu0
        %v435 = vadd.f32 0.0, %v434
        %v436 = vpop.f32.mrf.mxu0
        %v437 = vpop.f32.mrf.mxu0
        %v438 = vpop.f32.mrf.mxu0
        %439 = vdwg.mxu0
        %v440 = vadd.f32 %v376, %v435
        %v441 = vld [vmem:[%s4] sm:$0xf]
        %443 = vset.pattern.permute.xlu0 0
        %444 = vperm.xlu0 %443, %v441
        %v445 = vpop.permute.xlu0 %444
        %v447 = vadd.f32 %v440, %v445
        %v448 = vmax.f32 %v447, 0.0
        %449 = vst [vmem:[%s295] sm:$0xf] %v448
        %v450 = vpack.c.bf16 %v376, %v376
        %v453 = vunpack.c.l.s4 1983009808
        %v454 = vunpack.c.0.s8 %v453
        %v455 = vlaneseq
        %v456 = vshrl.u32 %v455, 7
        %v457 = vsub.s32 %v454, %v456
        %v458 = vrot.slane %v450, %v457
        %v459 = vcombine.high %v458, %v458
        %461 = vst [vmem:[%s302] sm:$0x3] %v459
        %s462 = sand.u32 %s165, 1
        %s463 = scalar_lea.sflag [#allocation3], %s462
        %s464 = sand.u32 %s165, 1
        %s465 = smul.addr %s464, 4
        %s466 = scalar_lea.vmem [#allocation2], %s465
        %s467 = sand.u32 %s193, 1
        %s468 = scalar_lea.sflag [#allocation5], %s467
        %s469 = sand.u32 %s193, 1
        %s470 = smul.addr %s469, 2
        %s471 = scalar_lea.vmem [#allocation4], %s470
        // Predicated region
        $region41: #{tpu_custom_call.1} parent=39 // pred_check
          %p472 = pneg %p175
        $region42: #{tpu_custom_call.1} parent=39 // pred_check_branch
          %474 = sbr.rel (%p472) target = $region44
        $region43: #{tpu_custom_call.1} parent=39 // pred_region
          %s476 = ssub.s32 64, 64
          %477 = vsyncadd %s463, %s476
          %s478 = sadd.s32 %s29, %s28
          %s479 = smul.addr %s478, 64
          %s480 = scalar_lea.hbm %s5, %s479
          %s482 = sshll.u32 %s466, 4
          %s483 = int_to_ptr.vmem [resolvable:$true] %s482
          %485 = dma.vmem_to_hbm [thread:$0]  %s483, 64, %s480, %s463
        $region44: #{tpu_custom_call.1} parent=39 // pred_fallthru
          _
        // Predicated region
        $region45: #{tpu_custom_call.1} parent=39 // pred_check
          %p486 = pneg %p203
        $region46: #{tpu_custom_call.1} parent=39 // pred_check_branch
          %488 = sbr.rel (%p486) target = $region48
        $region47: #{tpu_custom_call.1} parent=39 // pred_region
          %s490 = ssub.s32 32, 32
          %491 = vsyncadd %s468, %s490
          %s492 = sadd.s32 %s29, %s28
          %s493 = smul.addr %s492, 32
          %s494 = scalar_lea.hbm %s6, %s493
          %s496 = sshll.u32 %s471, 4
          %s497 = int_to_ptr.vmem [resolvable:$true] %s496
          %499 = dma.vmem_to_hbm [thread:$0]  %s497, 32, %s494, %s468
        $region48: #{tpu_custom_call.1} parent=39 // pred_fallthru
          _
      $region40: #{tpu_custom_call.1} parent=5 // pred_fallthru
        _
      %p500 = scmp.le.s32.totalorder 2, %s19
      // Predicated region
      $region49: #{tpu_custom_call.1} parent=5 // pred_check
        %p501 = pneg %p500
      $region50: #{tpu_custom_call.1} parent=5 // pred_check_branch
        %503 = sbr.rel (%p501) target = $region52
      $region51: #{tpu_custom_call.1} parent=5 // pred_region
        %s504 = ssub.s32 %s19, 2
        // Predicated region
        $region53: #{tpu_custom_call.1} parent=51 // pred_check
          %p505 = pneg %p181
        $region54: #{tpu_custom_call.1} parent=51 // pred_check_branch
          %507 = sbr.rel (%p505) target = $region56
        $region55: #{tpu_custom_call.1} parent=51 // pred_region
          %s508 = sand.u32 %s166, 1
          %s509 = scalar_lea.sflag [#allocation3], %s508
          %s510 = sand.u32 %s166, 1
          %s511 = smul.addr %s510, 4
          %s512 = scalar_lea.vmem [#allocation2], %s511
          %513 = dma.done %s509, 64
        $region56: #{tpu_custom_call.1} parent=51 // pred_fallthru
          _
        // Predicated region
        $region57: #{tpu_custom_call.1} parent=51 // pred_check
          %p514 = pneg %p209
        $region58: #{tpu_custom_call.1} parent=51 // pred_check_branch
          %516 = sbr.rel (%p514) target = $region60
        $region59: #{tpu_custom_call.1} parent=51 // pred_region
          %s517 = sand.u32 %s194, 1
          %s518 = scalar_lea.sflag [#allocation5], %s517
          %s519 = sand.u32 %s194, 1
          %s520 = smul.addr %s519, 2
          %s521 = scalar_lea.vmem [#allocation4], %s520
          %522 = dma.done %s518, 32
        $region60: #{tpu_custom_call.1} parent=51 // pred_fallthru
          _
      $region52: #{tpu_custom_call.1} parent=5 // pred_fallthru
        _
    $region6: #{tpu_custom_call.1} parent=1 // loop_footer
      %s23 = sadd.s32 1, %s19
    $region7: #{tpu_custom_call.1} parent=1 // loop_footer_branch
      %18 = sbr.rel target = $region3
    $region8: #{tpu_custom_call.1} parent=1 // loop_exit
      _
    %523 = vsyncpa [#allocation3], 1
    %s524 = scalar_lea.sflag [#allocation3], 1
    %525 = vsyncpa %s524, 1
    %526 = vsyncpa [#allocation5], 1
    %s527 = scalar_lea.sflag [#allocation5], 1
    %528 = vsyncpa %s527, 1

</llo_original>
